<compile_context>
chip_gen: v7x
topology: tpu7x:2x2x1
jax: 0.10.0
libtpu: 0.0.40
codegen_flags: <defaults>
</compile_context>

<pallas_src>
import jax
import jax.numpy as jnp
from jax.experimental import pallas as pl
from jax.experimental.pallas import tpu as pltpu

BN_EPS = 1e-5


def _mlp_kernel(x_ref, w1_ref, gamma_ref, beta_ref, w2_ref, b2_ref, o_ref):
    k = pl.program_id(0)

    # Init the resident f32 output block with the second-linear bias so the
    # rest of the grid is a pure accumulate (no finalize pass needed).
    @pl.when(k == 0)
    def _():
        o_ref[...] = jnp.broadcast_to(b2_ref[...], o_ref.shape).astype(o_ref.dtype)

    # Linear 1 (bias-free): bf16 x bf16 on the MXU, f32 accumulate.  [B, th]
    h = jnp.dot(x_ref[...], w1_ref[...], preferred_element_type=jnp.float32)

    # BatchNorm1d training-mode stats over the FULL batch (B is un-tiled),
    # folded into a single scale/shift on the centered activations, then ReLU.
    mean = jnp.mean(h, axis=0, keepdims=True)                  # [1, th]
    hc = h - mean
    var = jnp.mean(hc * hc, axis=0, keepdims=True)             # biased variance
    scale = gamma_ref[...] * jax.lax.rsqrt(var + BN_EPS)       # [1, th], EUP rsqrt
    h = jnp.maximum(hc * scale + beta_ref[...], 0.0)           # [B, th]

    # Linear 2 partial product over this H tile, accumulated in the resident
    # f32 output block.
    o_ref[...] += jnp.dot(h.astype(w2_ref.dtype), w2_ref[...],
                          preferred_element_type=jnp.float32)


def mlp_forward(x, w1_t, gamma, beta, w2_t, b2, *, tile_h=None):
    """x: [B, D_in] bf16; w1_t: [D_in, H] bf16; gamma/beta: [1, H] f32;
    w2_t: [H, O] bf16; b2: [1, O] f32.  Returns [B, O] f32."""
    B, D = x.shape
    H = w1_t.shape[1]
    O = w2_t.shape[1]
    if tile_h is None:
        tile_h = min(H, 512)
    assert H % tile_h == 0, "hidden size must be a multiple of tile_h"

    return pl.pallas_call(
        _mlp_kernel,
        out_shape=jax.ShapeDtypeStruct((B, O), jnp.float32),
        grid_spec=pltpu.PrefetchScalarGridSpec(
            num_scalar_prefetch=0,
            grid=(H // tile_h,),
            in_specs=[
                pl.BlockSpec((B, D), lambda k: (0, 0)),        # x: resident across H tiles
                pl.BlockSpec((D, tile_h), lambda k: (0, k)),   # w1 tile streams (double-buffered)
                pl.BlockSpec((1, tile_h), lambda k: (0, k)),   # gamma tile
                pl.BlockSpec((1, tile_h), lambda k: (0, k)),   # beta tile
                pl.BlockSpec((tile_h, O), lambda k: (k, 0)),   # w2 tile streams (double-buffered)
                pl.BlockSpec((1, O), lambda k: (0, 0)),        # bias: resident
            ],
            out_specs=pl.BlockSpec((B, O), lambda k: (0, 0)),  # resident accumulator block
        ),
        compiler_params=pltpu.CompilerParams(
            dimension_semantics=("arbitrary",),                # H is a reduction axis
        ),
    )(x, w1_t, gamma, beta, w2_t, b2)


def init_params(key, input_dim, hidden_size, output_dim):
    k1, k2, k3 = jax.random.split(key, 3)
    # Shapes match the PyTorch module's parameters (weights pre-transposed, bf16).
    w1_t = (jax.random.normal(k1, (input_dim, hidden_size), jnp.float32) * 0.05
            ).astype(jnp.bfloat16)
    gamma = jnp.ones((1, hidden_size), jnp.float32)        # BatchNorm1d weight
    beta = jnp.zeros((1, hidden_size), jnp.float32)        # BatchNorm1d bias
    w2_t = (jax.random.normal(k2, (hidden_size, output_dim), jnp.float32) * 0.05
            ).astype(jnp.bfloat16)
    b2 = jax.random.normal(k3, (1, output_dim), jnp.float32) * 0.01
    return w1_t, gamma, beta, w2_t, b2


def reference_forward(x, w1_t, gamma, beta, w2_t, b2):
    # Pure-JAX reference using the same bf16-quantized operands as the kernel.
    xf = x.astype(jnp.float32)
    w1f = w1_t.astype(jnp.float32)
    w2f = w2_t.astype(jnp.float32)
    h = jnp.dot(xf, w1f, preferred_element_type=jnp.float32)
    mean = h.mean(axis=0, keepdims=True)
    var = ((h - mean) ** 2).mean(axis=0, keepdims=True)
    h = (h - mean) * jax.lax.rsqrt(var + BN_EPS) * gamma + beta
    h = jnp.maximum(h, 0.0)
    h = h.astype(jnp.bfloat16).astype(jnp.float32)  # match kernel's bf16 second matmul input
    return jnp.dot(h, w2f, preferred_element_type=jnp.float32) + b2


if __name__ == "__main__":
    # Small, lane-dense shapes consistent with the module (multiples of 128).
    batch, input_dim, hidden_size, output_dim = 16, 128, 256, 128

    key = jax.random.PRNGKey(0)
    kx, kp = jax.random.split(key)
    x = jax.random.normal(kx, (batch, input_dim), jnp.float32).astype(jnp.bfloat16)
    params = init_params(kp, input_dim, hidden_size, output_dim)

    # tile_h=128 so the grid has 2 reduction steps and exercises the
    # accumulator init / accumulate path.
    out = mlp_forward(x, *params, tile_h=128)
    out = jax.block_until_ready(out)

    ref = reference_forward(x, *params)
    assert out.shape == (batch, output_dim)
    assert jnp.allclose(out, ref, atol=5e-3, rtol=5e-3), "mismatch vs JAX reference"

    print("KERNEL_OK")
</pallas_src>

<mosaic_0001>
module attributes {stable_mosaic.version = 11 : i64} {
  func.func @_mlp_kernel(%arg0: i32, %arg1: memref<16x128xbf16, #tpu.memory_space<vmem>>, %arg2: memref<128x128xbf16, #tpu.memory_space<vmem>>, %arg3: memref<1x128xf32, #tpu.memory_space<vmem>>, %arg4: memref<1x128xf32, #tpu.memory_space<vmem>>, %arg5: memref<128x128xbf16, #tpu.memory_space<vmem>>, %arg6: memref<1x128xf32, #tpu.memory_space<vmem>>, %arg7: memref<16x128xf32, #tpu.memory_space<vmem>>) attributes {dimension_semantics = [#tpu.dimension_semantics<arbitrary>], iteration_bounds = array<i64: 2>, scalar_prefetch = 0 : i64, scratch_operands = 0 : i64, tpu.core_type = #tpu.core_type<tc>, window_params = [{pipeline_mode = #tpu.pipeline_mode<synchronous>, transform_indices = @transform_0, window_bounds = array<i64: 16, 128>}, {transform_indices = @transform_1, window_bounds = array<i64: 128, 128>}, {transform_indices = @transform_2, window_bounds = array<i64: 1, 128>}, {transform_indices = @transform_3, window_bounds = array<i64: 1, 128>}, {transform_indices = @transform_4, window_bounds = array<i64: 128, 128>}, {pipeline_mode = #tpu.pipeline_mode<synchronous>, transform_indices = @transform_5, window_bounds = array<i64: 1, 128>}, {pipeline_mode = #tpu.pipeline_mode<synchronous>, transform_indices = @transform_6, window_bounds = array<i64: 16, 128>}]} {
    %c0_i32 = arith.constant 0 : i32
    %0 = arith.cmpi eq, %arg0, %c0_i32 : i32
    %1 = arith.extui %0 : i1 to i32
    %c0_i32_0 = arith.constant 0 : i32
    %2 = arith.cmpi ne, %1, %c0_i32_0 : i32
    scf.if %2 {
      %c0_21 = arith.constant 0 : index
      %c0_22 = arith.constant 0 : index
      %35 = vector.load %arg6[%c0_21, %c0_22] : memref<1x128xf32, #tpu.memory_space<vmem>>, vector<1x128xf32>
      %36 = vector.shape_cast %35 : vector<1x128xf32> to vector<1x128xf32>
      %37 = vector.broadcast %36 : vector<1x128xf32> to vector<16x128xf32>
      %c0_23 = arith.constant 0 : index
      %c0_24 = arith.constant 0 : index
      %38 = vector.load %arg7[%c0_23, %c0_24] : memref<16x128xf32, #tpu.memory_space<vmem>>, vector<16x128xf32>
      tpu.vector_store %arg7[%c0_23, %c0_24], %37 {strides = array<i32>} : memref<16x128xf32, #tpu.memory_space<vmem>>, vector<16x128xf32>,
    } else {
    }
    %c0 = arith.constant 0 : index
    %c0_1 = arith.constant 0 : index
    %3 = vector.load %arg1[%c0, %c0_1] : memref<16x128xbf16, #tpu.memory_space<vmem>>, vector<16x128xbf16>
    %c0_2 = arith.constant 0 : index
    %c0_3 = arith.constant 0 : index
    %4 = vector.load %arg2[%c0_2, %c0_3] : memref<128x128xbf16, #tpu.memory_space<vmem>>, vector<128x128xbf16>
    %cst = arith.constant dense<0.000000e+00> : vector<16x128xf32>
    %5 = tpu.matmul %3, %4, %cst {dimension_numbers = #tpu.dot_dimension_numbers<[1], [0], [0], [1], [0, 0, 1, 1], [], []>} : vector<16x128xbf16>, vector<128x128xbf16>, vector<16x128xf32> -> vector<16x128xf32>
    %cst_4 = arith.constant dense<0.000000e+00> : vector<128xf32>
    %6 = vector.multi_reduction <add>, %5, %cst_4 [0] : vector<16x128xf32> to vector<128xf32>
    %7 = vector.shape_cast %6 : vector<128xf32> to vector<1x128xf32>
    %cst_5 = arith.constant 1.600000e+01 : f32
    %8 = vector.broadcast %cst_5 : f32 to vector<1x128xf32>
    %9 = arith.divf %7, %8 : vector<1x128xf32>
    %10 = vector.broadcast %9 : vector<1x128xf32> to vector<16x128xf32>
    %11 = arith.subf %5, %10 : vector<16x128xf32>
    %12 = arith.mulf %11, %11 : vector<16x128xf32>
    %cst_6 = arith.constant dense<0.000000e+00> : vector<128xf32>
    %13 = vector.multi_reduction <add>, %12, %cst_6 [0] : vector<16x128xf32> to vector<128xf32>
    %14 = vector.shape_cast %13 : vector<128xf32> to vector<1x128xf32>
    %cst_7 = arith.constant 1.600000e+01 : f32
    %15 = vector.broadcast %cst_7 : f32 to vector<1x128xf32>
    %16 = arith.divf %14, %15 : vector<1x128xf32>
    %c0_8 = arith.constant 0 : index
    %c0_9 = arith.constant 0 : index
    %17 = vector.load %arg3[%c0_8, %c0_9] : memref<1x128xf32, #tpu.memory_space<vmem>>, vector<1x128xf32>
    %cst_10 = arith.constant 9.99999974E-6 : f32
    %18 = vector.broadcast %cst_10 : f32 to vector<1x128xf32>
    %19 = arith.addf %16, %18 : vector<1x128xf32>
    %20 = math.rsqrt %19 : vector<1x128xf32>
    %21 = arith.mulf %17, %20 : vector<1x128xf32>
    %22 = vector.broadcast %21 : vector<1x128xf32> to vector<16x128xf32>
    %23 = arith.mulf %11, %22 : vector<16x128xf32>
    %c0_11 = arith.constant 0 : index
    %c0_12 = arith.constant 0 : index
    %24 = vector.load %arg4[%c0_11, %c0_12] : memref<1x128xf32, #tpu.memory_space<vmem>>, vector<1x128xf32>
    %25 = vector.broadcast %24 : vector<1x128xf32> to vector<16x128xf32>
    %26 = arith.addf %23, %25 : vector<16x128xf32>
    %cst_13 = arith.constant 0.000000e+00 : f32
    %27 = vector.broadcast %cst_13 : f32 to vector<16x128xf32>
    %28 = arith.maximumf %26, %27 : vector<16x128xf32>
    %c0_14 = arith.constant 0 : index
    %c0_15 = arith.constant 0 : index
    %29 = vector.load %arg7[%c0_14, %c0_15] : memref<16x128xf32, #tpu.memory_space<vmem>>, vector<16x128xf32>
    %30 = arith.truncf %28 : vector<16x128xf32> to vector<16x128xbf16>
    %c0_16 = arith.constant 0 : index
    %c0_17 = arith.constant 0 : index
    %31 = vector.load %arg5[%c0_16, %c0_17] : memref<128x128xbf16, #tpu.memory_space<vmem>>, vector<128x128xbf16>
    %cst_18 = arith.constant dense<0.000000e+00> : vector<16x128xf32>
    %32 = tpu.matmul %30, %31, %cst_18 {dimension_numbers = #tpu.dot_dimension_numbers<[1], [0], [0], [1], [0, 0, 1, 1], [], []>} : vector<16x128xbf16>, vector<128x128xbf16>, vector<16x128xf32> -> vector<16x128xf32>
    %33 = arith.addf %29, %32 : vector<16x128xf32>
    %c0_19 = arith.constant 0 : index
    %c0_20 = arith.constant 0 : index
    %34 = vector.load %arg7[%c0_19, %c0_20] : memref<16x128xf32, #tpu.memory_space<vmem>>, vector<16x128xf32>
    tpu.vector_store %arg7[%c0_19, %c0_20], %33 {strides = array<i32>} : memref<16x128xf32, #tpu.memory_space<vmem>>, vector<16x128xf32>,
    return
  }
  func.func @transform_0(%arg0: i32) -> (i32, i32) {
    %c0_i32 = arith.constant 0 : i32
    %c0_i32_0 = arith.constant 0 : i32
    %c0_i32_1 = arith.constant 0 : i32
    return %c0_i32, %c0_i32_0 : i32, i32
  }
  func.func @transform_1(%arg0: i32) -> (i32, i32) {
    %c0_i32 = arith.constant 0 : i32
    %c0_i32_0 = arith.constant 0 : i32
    return %c0_i32, %arg0 : i32, i32
  }
  func.func @transform_2(%arg0: i32) -> (i32, i32) {
    %c0_i32 = arith.constant 0 : i32
    %c0_i32_0 = arith.constant 0 : i32
    return %c0_i32, %arg0 : i32, i32
  }
  func.func @transform_3(%arg0: i32) -> (i32, i32) {
    %c0_i32 = arith.constant 0 : i32
    %c0_i32_0 = arith.constant 0 : i32
    return %c0_i32, %arg0 : i32, i32
  }
  func.func @transform_4(%arg0: i32) -> (i32, i32) {
    %c0_i32 = arith.constant 0 : i32
    %c0_i32_0 = arith.constant 0 : i32
    return %arg0, %c0_i32 : i32, i32
  }
  func.func @transform_5(%arg0: i32) -> (i32, i32) {
    %c0_i32 = arith.constant 0 : i32
    %c0_i32_0 = arith.constant 0 : i32
    %c0_i32_1 = arith.constant 0 : i32
    return %c0_i32, %c0_i32_0 : i32, i32
  }
  func.func @transform_6(%arg0: i32) -> (i32, i32) {
    %c0_i32 = arith.constant 0 : i32
    %c0_i32_0 = arith.constant 0 : i32
    %c0_i32_1 = arith.constant 0 : i32
    return %c0_i32, %c0_i32_0 : i32, i32
  }
}

</mosaic_0001>

<llo_original>
// kernel: tpu_custom_call.1
$region0: #{tpu_custom_call.1}
  #allocation0 [shape = 'u32[]', space=smem, size = 0x4, offset = 0x4, fixed_abs, tag = 'smem constant byte address 0x4 - core index']
  #allocation1 [shape = 'u32[144,128]{1,0:T(1,128)}', space=vmem, size = 0x12000, scoped, tag = 'internal scratch']
  %s0 = inlined_call_operand.hbm [shape: bf16[16,128], index: 0, kind: input, shape index: {}]
  %s1 = inlined_call_operand.hbm [shape: bf16[128,256], index: 1, kind: input, shape index: {}]
  %s2 = inlined_call_operand.vmem [shape: f32[1,256], index: 2, kind: input, shape index: {}]
  %s3 = inlined_call_operand.vmem [shape: f32[1,256], index: 3, kind: input, shape index: {}]
  %s4 = inlined_call_operand.hbm [shape: bf16[256,128], index: 4, kind: input, shape index: {}]
  %s5 = inlined_call_operand.vmem [shape: f32[1,128], index: 5, kind: input, shape index: {}]
  %s6 = inlined_call_operand.hbm [shape: f32[16,128], index: 6, kind: output, shape index: {}]
  %s7 = sld [smem:[#allocation0]]
  $region73: #{tpu_custom_call.1} parent=0
    _
  %s9 = ssub.s32 1, %s7
  %s10 = scalar_select 0, %s9, %s7
  $region1: #{tpu_custom_call.1} parent=0
    #allocation2 [shape = 'u8[4096]{0}', space=vmem, size = 0x1000, scoped, tag = 'input window, operand 0, single buffered']
    #allocation3 [shape = 's32[2]{0}', space=sflag, size = 0x8, scoped, tag = 'scoped memory for tpu_custom_call.1']
    #allocation4 [shape = 's32[2]{0}', space=sflag, size = 0x8, scoped, tag = 'scoped memory for tpu_custom_call.1']
    #allocation5 [shape = 'u8[65536]{0}', space=vmem, size = 0x10000, scoped, tag = 'input window, operand 1']
    #allocation6 [shape = 's32[2]{0}', space=sflag, size = 0x8, scoped, tag = 'scoped memory for tpu_custom_call.1']
    #allocation7 [shape = 'u8[65536]{0}', space=vmem, size = 0x10000, scoped, tag = 'input window, operand 4']
    #allocation8 [shape = 'u8[8192]{0}', space=vmem, size = 0x2000, scoped, tag = 'output window, operand 0, single buffered']
    %11 = vsyncpa [#allocation3], 0
    %12 = vsyncpa [#allocation6], 0
    %s13 = scalar_lea.sflag [#allocation6], 1
    %14 = vsyncpa %s13, 0
    %15 = vsyncpa [#allocation4], 0
    loop: start=0, step=1, limit=4
    $region2: #{tpu_custom_call.1} parent=1 // loop_pre_header
      _
    $region3: #{tpu_custom_call.1} parent=1 // loop_header
      %s17 = sphi 0, %s21
      %p18 = scmp.ge.s32.totalorder %s17, 4
      %s25 = sphi 0, %s25
      %s27 = sphi 0, %s25
      %s28 = sphi 0, %s27
      %s42 = sphi 0, %s28
      %s48 = sphi 0, %s50
      %s51 = sphi 0, %s48
      %s52 = sphi 0, %s51
      %s68 = sphi 0, %s52
      %s74 = sphi 0, %s76
      %s77 = sphi 0, %s74
      %s78 = sphi 0, %s77
      %s94 = sphi 0, %s78
      %s100 = sphi 0, %s102
      %s103 = sphi 0, %s100
      %s104 = sphi 0, %s103
      %s120 = sphi 0, %s104
      %s126 = sphi 0, %s128
      %s129 = sphi 0, %s126
      %s130 = sphi 0, %s129
      %s146 = sphi 0, %s130
      %s150 = sphi 0, %s150
      %s152 = sphi 0, %s150
      %s153 = sphi 0, %s152
      %s167 = sphi 0, %s153
      %s171 = sphi 0, %s171
      %s173 = sphi 0, %s171
      %s174 = sphi 0, %s173
      %s188 = sphi 0, %s174
    $region4: #{tpu_custom_call.1} parent=1 // loop_header_branch
      %20 = sbr.rel (%p18) target = $region8
    $region5: #{tpu_custom_call.1} parent=1 // loop_body
      %s22 = ssub.s32 %s17, 1
      %s23 = ssub.s32 %s17, 2
      %s24 = sadd.s32 %s17, 1
      %s26 = sadd.s32 %s25, 1
      %p29 = scmp.eq.s32.totalorder %s17, 1
      %p30 = scmp.ne.s32.totalorder %s25, %s27
      %p31 = scmp.eq.s32.totalorder %s17, 0
      %p32 = por %p30, %p31
      %p33 = scmp.ne.s32.totalorder %s25, %s27
      %p34 = scmp.eq.s32.totalorder %s22, 1
      %p35 = por %p33, %p34
      %p36 = scmp.ne.s32.totalorder %s27, %s28
      %p37 = scmp.eq.s32.totalorder %s22, 0
      %p38 = por %p36, %p37
      %p39 = scmp.ne.s32.totalorder %s27, %s28
      %p40 = scmp.eq.s32.totalorder %s23, 1
      %p41 = por %p39, %p40
      %p43 = scmp.ne.s32.totalorder %s28, %s42
      %p44 = scmp.eq.s32.totalorder %s23, 0
      %p45 = por %p43, %p44
      %s46 = ssub.s32 %s17, %s24
      %p47 = scmp.eq.s32.totalorder %s46, 0
      %s49 = sadd.s32 %s48, 1
      %s50 = scalar_select %p47, %s48, %s49
      %p53 = pneg %p47
      %p54 = scmp.eq.s32.totalorder %s17, 1
      %p55 = por %p53, %p54
      %p56 = scmp.ne.s32.totalorder %s48, %s51
      %p57 = scmp.eq.s32.totalorder %s17, 0
      %p58 = por %p56, %p57
      %p59 = scmp.ne.s32.totalorder %s48, %s51
      %p60 = scmp.eq.s32.totalorder %s22, 1
      %p61 = por %p59, %p60
      %p62 = scmp.ne.s32.totalorder %s51, %s52
      %p63 = scmp.eq.s32.totalorder %s22, 0
      %p64 = por %p62, %p63
      %p65 = scmp.ne.s32.totalorder %s51, %s52
      %p66 = scmp.eq.s32.totalorder %s23, 1
      %p67 = por %p65, %p66
      %p69 = scmp.ne.s32.totalorder %s52, %s68
      %p70 = scmp.eq.s32.totalorder %s23, 0
      %p71 = por %p69, %p70
      %s72 = ssub.s32 %s17, %s24
      %p73 = scmp.eq.s32.totalorder %s72, 0
      %s75 = sadd.s32 %s74, 1
      %s76 = scalar_select %p73, %s74, %s75
      %p79 = pneg %p73
      %p80 = scmp.eq.s32.totalorder %s17, 1
      %p81 = por %p79, %p80
      %p82 = scmp.ne.s32.totalorder %s74, %s77
      %p83 = scmp.eq.s32.totalorder %s17, 0
      %p84 = por %p82, %p83
      %p85 = scmp.ne.s32.totalorder %s74, %s77
      %p86 = scmp.eq.s32.totalorder %s22, 1
      %p87 = por %p85, %p86
      %p88 = scmp.ne.s32.totalorder %s77, %s78
      %p89 = scmp.eq.s32.totalorder %s22, 0
      %p90 = por %p88, %p89
      %p91 = scmp.ne.s32.totalorder %s77, %s78
      %p92 = scmp.eq.s32.totalorder %s23, 1
      %p93 = por %p91, %p92
      %p95 = scmp.ne.s32.totalorder %s78, %s94
      %p96 = scmp.eq.s32.totalorder %s23, 0
      %p97 = por %p95, %p96
      %s98 = ssub.s32 %s17, %s24
      %p99 = scmp.eq.s32.totalorder %s98, 0
      %s101 = sadd.s32 %s100, 1
      %s102 = scalar_select %p99, %s100, %s101
      %p105 = pneg %p99
      %p106 = scmp.eq.s32.totalorder %s17, 1
      %p107 = por %p105, %p106
      %p108 = scmp.ne.s32.totalorder %s100, %s103
      %p109 = scmp.eq.s32.totalorder %s17, 0
      %p110 = por %p108, %p109
      %p111 = scmp.ne.s32.totalorder %s100, %s103
      %p112 = scmp.eq.s32.totalorder %s22, 1
      %p113 = por %p111, %p112
      %p114 = scmp.ne.s32.totalorder %s103, %s104
      %p115 = scmp.eq.s32.totalorder %s22, 0
      %p116 = por %p114, %p115
      %p117 = scmp.ne.s32.totalorder %s103, %s104
      %p118 = scmp.eq.s32.totalorder %s23, 1
      %p119 = por %p117, %p118
      %p121 = scmp.ne.s32.totalorder %s104, %s120
      %p122 = scmp.eq.s32.totalorder %s23, 0
      %p123 = por %p121, %p122
      %s124 = ssub.s32 %s17, %s24
      %p125 = scmp.eq.s32.totalorder %s124, 0
      %s127 = sadd.s32 %s126, 1
      %s128 = scalar_select %p125, %s126, %s127
      %p131 = pneg %p125
      %p132 = scmp.eq.s32.totalorder %s17, 1
      %p133 = por %p131, %p132
      %p134 = scmp.ne.s32.totalorder %s126, %s129
      %p135 = scmp.eq.s32.totalorder %s17, 0
      %p136 = por %p134, %p135
      %p137 = scmp.ne.s32.totalorder %s126, %s129
      %p138 = scmp.eq.s32.totalorder %s22, 1
      %p139 = por %p137, %p138
      %p140 = scmp.ne.s32.totalorder %s129, %s130
      %p141 = scmp.eq.s32.totalorder %s22, 0
      %p142 = por %p140, %p141
      %p143 = scmp.ne.s32.totalorder %s129, %s130
      %p144 = scmp.eq.s32.totalorder %s23, 1
      %p145 = por %p143, %p144
      %p147 = scmp.ne.s32.totalorder %s130, %s146
      %p148 = scmp.eq.s32.totalorder %s23, 0
      %p149 = por %p147, %p148
      %s151 = sadd.s32 %s150, 1
      %p154 = scmp.eq.s32.totalorder %s17, 1
      %p155 = scmp.ne.s32.totalorder %s150, %s152
      %p156 = scmp.eq.s32.totalorder %s17, 0
      %p157 = por %p155, %p156
      %p158 = scmp.ne.s32.totalorder %s150, %s152
      %p159 = scmp.eq.s32.totalorder %s22, 1
      %p160 = por %p158, %p159
      %p161 = scmp.ne.s32.totalorder %s152, %s153
      %p162 = scmp.eq.s32.totalorder %s22, 0
      %p163 = por %p161, %p162
      %p164 = scmp.ne.s32.totalorder %s152, %s153
      %p165 = scmp.eq.s32.totalorder %s23, 1
      %p166 = por %p164, %p165
      %p168 = scmp.ne.s32.totalorder %s153, %s167
      %p169 = scmp.eq.s32.totalorder %s23, 0
      %p170 = por %p168, %p169
      %s172 = sadd.s32 %s171, 1
      %p175 = scmp.eq.s32.totalorder %s17, 1
      %p176 = scmp.ne.s32.totalorder %s171, %s173
      %p177 = scmp.eq.s32.totalorder %s17, 0
      %p178 = por %p176, %p177
      %p179 = scmp.ne.s32.totalorder %s171, %s173
      %p180 = scmp.eq.s32.totalorder %s22, 1
      %p181 = por %p179, %p180
      %p182 = scmp.ne.s32.totalorder %s173, %s174
      %p183 = scmp.eq.s32.totalorder %s22, 0
      %p184 = por %p182, %p183
      %p185 = scmp.ne.s32.totalorder %s173, %s174
      %p186 = scmp.eq.s32.totalorder %s23, 1
      %p187 = por %p185, %p186
      %p189 = scmp.ne.s32.totalorder %s174, %s188
      %p190 = scmp.eq.s32.totalorder %s23, 0
      %p191 = por %p189, %p190
      %p192 = scmp.le.s32.totalorder 1, %s17
      %p193 = scmp.lt.s32.totalorder %s17, 3
      %p194 = pnand %p192, %p193
      %p195 = pneg %p194
      // Predicated region
      $region9: #{tpu_custom_call.1} parent=5 // pred_check
        _
      $region10: #{tpu_custom_call.1} parent=5 // pred_check_branch
        %197 = sbr.rel (%p194) target = $region12
      $region11: #{tpu_custom_call.1} parent=5 // pred_region
        %s198 = ssub.s32 %s17, 1
        // Predicated region
        $region13: #{tpu_custom_call.1} parent=11 // pred_check
          %p199 = pneg %p38
        $region14: #{tpu_custom_call.1} parent=11 // pred_check_branch
          %201 = sbr.rel (%p199) target = $region16
        $region15: #{tpu_custom_call.1} parent=11 // pred_region
          %s203 = ssub.s32 128, 128
          %204 = vsyncadd [#allocation3], %s203
          %s205 = sshll.u32 [#allocation2], 4
          %s206 = int_to_ptr.vmem [resolvable:$true] %s205
          %211 = dma.hbm_to_vmem [thread:$0]  %s0, 128, %s206, [#allocation3], 64, 64, 4
        $region16: #{tpu_custom_call.1} parent=11 // pred_fallthru
          _
        // Predicated region
        $region17: #{tpu_custom_call.1} parent=11 // pred_check
          %p212 = pneg %p163
        $region18: #{tpu_custom_call.1} parent=11 // pred_check_branch
          %214 = sbr.rel (%p212) target = $region20
        $region19: #{tpu_custom_call.1} parent=11 // pred_region
          _
        $region20: #{tpu_custom_call.1} parent=11 // pred_fallthru
          _
      $region12: #{tpu_custom_call.1} parent=5 // pred_fallthru
        _
      %p215 = scmp.lt.s32.totalorder %s17, 2
      // Predicated region
      $region21: #{tpu_custom_call.1} parent=5 // pred_check
        %p216 = pneg %p215
      $region22: #{tpu_custom_call.1} parent=5 // pred_check_branch
        %218 = sbr.rel (%p216) target = $region24
      $region23: #{tpu_custom_call.1} parent=5 // pred_region
        // Predicated region
        $region25: #{tpu_custom_call.1} parent=23 // pred_check
          %p219 = pneg %p58
        $region26: #{tpu_custom_call.1} parent=23 // pred_check_branch
          %221 = sbr.rel (%p219) target = $region28
        $region27: #{tpu_custom_call.1} parent=23 // pred_region
          %s222 = sand.u32 %s17, 1
          %s223 = scalar_lea.sflag [#allocation6], %s222
          %s224 = sand.u32 %s48, 1
          %s225 = smul.addr %s224, 64
          %s226 = scalar_lea.vmem [#allocation5], %s225
          %s228 = ssub.s32 1024, 1024
          %229 = vsyncadd %s223, %s228
          %s230 = smul.addr %s17, 64
          %s231 = scalar_lea.hbm %s1, %s230
          %s232 = sshll.u32 %s226, 4
          %s233 = int_to_ptr.vmem [resolvable:$true] %s232
          %238 = dma.hbm_to_vmem [thread:$0]  %s231, 1024, %s233, %s223, 128, 64, 4
        $region28: #{tpu_custom_call.1} parent=23 // pred_fallthru
          _
        // Predicated region
        $region29: #{tpu_custom_call.1} parent=23 // pred_check
          %p239 = pneg %p84
        $region30: #{tpu_custom_call.1} parent=23 // pred_check_branch
          %241 = sbr.rel (%p239) target = $region32
        $region31: #{tpu_custom_call.1} parent=23 // pred_region
          %p242 = scmp.lt.s32.totalorder %s17, 1
          %s243 = scalar_select %p242, %s17, 1
          %s244 = scalar_lea.vmem %s2, %s243
        $region32: #{tpu_custom_call.1} parent=23 // pred_fallthru
          _
        // Predicated region
        $region33: #{tpu_custom_call.1} parent=23 // pred_check
          %p245 = pneg %p110
        $region34: #{tpu_custom_call.1} parent=23 // pred_check_branch
          %247 = sbr.rel (%p245) target = $region36
        $region35: #{tpu_custom_call.1} parent=23 // pred_region
          %p248 = scmp.lt.s32.totalorder %s17, 1
          %s249 = scalar_select %p248, %s17, 1
          %s250 = scalar_lea.vmem %s3, %s249
        $region36: #{tpu_custom_call.1} parent=23 // pred_fallthru
          _
        // Predicated region
        $region37: #{tpu_custom_call.1} parent=23 // pred_check
          %p251 = pneg %p136
        $region38: #{tpu_custom_call.1} parent=23 // pred_check_branch
          %253 = sbr.rel (%p251) target = $region40
        $region39: #{tpu_custom_call.1} parent=23 // pred_region
          %s254 = sand.u32 %s17, 1
          %s255 = scalar_lea.sflag [#allocation6], %s254
          %s256 = sand.u32 %s126, 1
          %s257 = smul.addr %s256, 64
          %s258 = scalar_lea.vmem [#allocation7], %s257
          %s259 = smul.u32 16, %s17
          %s261 = ssub.s32 1024, 1024
          %262 = vsyncadd %s255, %s261
          %s263 = smul.addr %s259, 64
          %s264 = scalar_lea.hbm %s4, %s263
          %s265 = sshll.u32 %s258, 4
          %s266 = int_to_ptr.vmem [resolvable:$true] %s265
          %271 = dma.hbm_to_vmem [thread:$0]  %s264, 1024, %s266, %s255, 64, 64, 4
        $region40: #{tpu_custom_call.1} parent=23 // pred_fallthru
          _
      $region24: #{tpu_custom_call.1} parent=5 // pred_fallthru
        _
      %p272 = scmp.le.s32.totalorder 1, %s17
      %p273 = scmp.lt.s32.totalorder %s17, 3
      %p274 = pnand %p272, %p273
      %p275 = pneg %p274
      // Predicated region
      $region41: #{tpu_custom_call.1} parent=5 // pred_check
        _
      $region42: #{tpu_custom_call.1} parent=5 // pred_check_branch
        %277 = sbr.rel (%p274) target = $region44
      $region43: #{tpu_custom_call.1} parent=5 // pred_region
        %s278 = ssub.s32 %s17, 1
        // Predicated region
        $region45: #{tpu_custom_call.1} parent=43 // pred_check
          %p279 = pneg %p38
        $region46: #{tpu_custom_call.1} parent=43 // pred_check_branch
          %281 = sbr.rel (%p279) target = $region48
        $region47: #{tpu_custom_call.1} parent=43 // pred_region
          %282 = dma.done [#allocation3], 128
        $region48: #{tpu_custom_call.1} parent=43 // pred_fallthru
          _
        %s283 = sand.u32 %s22, 1
        %s284 = scalar_lea.sflag [#allocation6], %s283
        %s285 = sand.u32 %s51, 1
        %s286 = smul.addr %s285, 64
        %s287 = scalar_lea.vmem [#allocation5], %s286
        // Predicated region
        $region49: #{tpu_custom_call.1} parent=43 // pred_check
          %p288 = pneg %p64
        $region50: #{tpu_custom_call.1} parent=43 // pred_check_branch
          %290 = sbr.rel (%p288) target = $region52
        $region51: #{tpu_custom_call.1} parent=43 // pred_region
          %291 = dma.done %s284, 1024
        $region52: #{tpu_custom_call.1} parent=43 // pred_fallthru
          _
        %s292 = sand.u32 %s22, 1
        %s293 = scalar_lea.sflag [#allocation6], %s292
        %s294 = sand.u32 %s129, 1
        %s295 = smul.addr %s294, 64
        %s296 = scalar_lea.vmem [#allocation7], %s295
        // Predicated region
        $region53: #{tpu_custom_call.1} parent=43 // pred_check
          %p297 = pneg %p142
        $region54: #{tpu_custom_call.1} parent=43 // pred_check_branch
          %299 = sbr.rel (%p297) target = $region56
        $region55: #{tpu_custom_call.1} parent=43 // pred_region
          %300 = dma.done %s293, 1024
        $region56: #{tpu_custom_call.1} parent=43 // pred_fallthru
          _
        %p301 = pneg %p38
        %p302 = pneg %p35
        %s303 = sand.u32 %s22, 1
        %s304 = scalar_lea.sflag [#allocation6], %s303
        %s305 = sand.u32 %s51, 1
        %s306 = smul.addr %s305, 64
        %s307 = scalar_lea.vmem [#allocation5], %s306
        %p308 = pneg %p64
        %p309 = pneg %p61
        %p310 = scmp.lt.s32.totalorder %s22, 1
        %s311 = scalar_select %p310, %s22, 1
        %s312 = scalar_lea.vmem %s2, %s311
        %p313 = pneg %p90
        %p314 = pneg %p87
        %p315 = scmp.lt.s32.totalorder %s22, 1
        %s316 = scalar_select %p315, %s22, 1
        %s317 = scalar_lea.vmem %s3, %s316
        %p318 = pneg %p116
        %p319 = pneg %p113
        %s320 = sand.u32 %s22, 1
        %s321 = scalar_lea.sflag [#allocation6], %s320
        %s322 = sand.u32 %s129, 1
        %s323 = smul.addr %s322, 64
        %s324 = scalar_lea.vmem [#allocation7], %s323
        %p325 = pneg %p142
        %p326 = pneg %p139
        %p327 = pneg %p163
        %p328 = pneg %p160
        %p329 = pneg %p184
        %p330 = pneg %p181
        %p331 = scmp.lt.s32.totalorder %s22, 1
        %s332 = scalar_select %p331, %s22, 1
        %s333 = scalar_lea.vmem %s2, %s332
        %p334 = scmp.lt.s32.totalorder %s22, 1
        %s335 = scalar_select %p334, %s22, 1
        %s336 = scalar_lea.vmem %s3, %s335
        %s337 = smul.u32 16, %s22
        %p339 = scmp.eq.s32.totalorder %s22, 0
        // Predicated region
        $region57: #{tpu_custom_call.1} parent=43 // pred_check
          %p340 = pneg %p339
        $region58: #{tpu_custom_call.1} parent=43 // pred_check_branch
          %342 = sbr.rel (%p340) target = $region60
        $region59: #{tpu_custom_call.1} parent=43 // pred_region
          %v343 = vld [vmem:[%s5] sm:$0x1]
          %v345 = vlaneseq
          %v346 = vshrl.u32 %v345, 7
          %v347 = vsub.s32 0, %v346
          %v348 = vrot.slane %v343, %v347
          %350 = vst [vmem:[#allocation8] sm:$0xff] %v348
          %351 = vst [vmem:[#allocation8 + $0x8] sm:$0xff] %v348
        $region60: #{tpu_custom_call.1} parent=43 // pred_fallthru
          _
        %v352 = vld [vmem:[#allocation2] sm:$0xf]
        %v353 = vld [vmem:[#allocation2 + $0x4] sm:$0xf]
        %v354 = vld [vmem:[%s287] sm:$0xf]
        %v355 = vld [vmem:[%s287 + $0x4] sm:$0xf]
        %v356 = vld [vmem:[%s287 + $0x8] sm:$0xf]
        %v357 = vld [vmem:[%s287 + $0xc] sm:$0xf]
        %v358 = vld [vmem:[%s287 + $0x10] sm:$0xf]
        %v359 = vld [vmem:[%s287 + $0x14] sm:$0xf]
        %v360 = vld [vmem:[%s287 + $0x18] sm:$0xf]
        %v361 = vld [vmem:[%s287 + $0x1c] sm:$0xf]
        %v362 = vld [vmem:[%s287 + $0x20] sm:$0xf]
        %v363 = vld [vmem:[%s287 + $0x24] sm:$0xf]
        %v364 = vld [vmem:[%s287 + $0x28] sm:$0xf]
        %v365 = vld [vmem:[%s287 + $0x2c] sm:$0xf]
        %v366 = vld [vmem:[%s287 + $0x30] sm:$0xf]
        %v367 = vld [vmem:[%s287 + $0x34] sm:$0xf]
        %v368 = vld [vmem:[%s287 + $0x38] sm:$0xf]
        %v369 = vld [vmem:[%s287 + $0x3c] sm:$0xf]
        %v372 = vunpack.c.l.b16 %v352
        %v373 = vunpack.c.l.b16 %v353
        %v374 = vpack.c.b16 %v373, %v372
        %v392 = vunpack.c.l.b16 %v354
        %v393 = vunpack.c.l.b16 %v355
        %v394 = vunpack.c.l.b16 %v356
        %v395 = vunpack.c.l.b16 %v357
        %v396 = vunpack.c.l.b16 %v358
        %v397 = vunpack.c.l.b16 %v359
        %v398 = vunpack.c.l.b16 %v360
        %v399 = vunpack.c.l.b16 %v361
        %v400 = vunpack.c.l.b16 %v362
        %v401 = vunpack.c.l.b16 %v363
        %v402 = vunpack.c.l.b16 %v364
        %v403 = vunpack.c.l.b16 %v365
        %v404 = vunpack.c.l.b16 %v366
        %v405 = vunpack.c.l.b16 %v367
        %v406 = vunpack.c.l.b16 %v368
        %v407 = vunpack.c.l.b16 %v369
        %v408 = vpack.c.b16 %v393, %v392
        %v409 = vpack.c.b16 %v395, %v394
        %v410 = vpack.c.b16 %v397, %v396
        %v411 = vpack.c.b16 %v399, %v398
        %v412 = vpack.c.b16 %v401, %v400
        %v413 = vpack.c.b16 %v403, %v402
        %v414 = vpack.c.b16 %v405, %v404
        %v415 = vpack.c.b16 %v407, %v406
        %424 = vmatprep.subr.bf16.mxu0 0
        %425 = vmatpush1.bf16.msra.mxu0 %v408
        %426 = vmatprep.subr.bf16.mxu0 0
        %427 = vmatpush1.bf16.msra.mxu0 %v409
        %428 = vmatprep.subr.bf16.mxu0 0
        %429 = vmatpush1.bf16.msra.mxu0 %v410
        %430 = vmatprep.subr.bf16.mxu0 0
        %431 = vmatpush1.bf16.msra.mxu0 %v411
        %432 = vmatprep.subr.bf16.mxu0 0
        %433 = vmatpush1.bf16.msra.mxu0 %v412
        %434 = vmatprep.subr.bf16.mxu0 0
        %435 = vmatpush1.bf16.msra.mxu0 %v413
        %436 = vmatprep.subr.bf16.mxu0 0
        %437 = vmatpush1.bf16.msra.mxu0 %v414
        %438 = vmatprep.subr.bf16.mxu0 0
        %439 = vmatpush1.bf16.msra.mxu0 %v415
        %440 = vmatprep.subr.bf16.mxu0 0
        %441 = vmatpush1.bf16.msra.mxu0 0
        %442 = vmatprep.subr.bf16.mxu0 0
        %443 = vmatpush1.bf16.msra.mxu0 0
        %444 = vmatprep.subr.bf16.mxu0 0
        %445 = vmatpush1.bf16.msra.mxu0 0
        %446 = vmatprep.subr.bf16.mxu0 0
        %447 = vmatpush1.bf16.msra.mxu0 0
        %448 = vmatprep.subr.bf16.mxu0 0
        %449 = vmatpush1.bf16.msra.mxu0 0
        %450 = vmatprep.subr.bf16.mxu0 0
        %451 = vmatpush1.bf16.msra.mxu0 0
        %452 = vmatprep.subr.bf16.mxu0 0
        %453 = vmatpush1.bf16.msra.mxu0 0
        %454 = vmatprep.subr.bf16.mxu0 0
        %455 = vmatpush1.bf16.msra.mxu0 0
        %456 = vmatprep.mubr.bf16.mxu0 0
        %457 = vmatmul.mubr.bf16.gmra.mrb[0].mxu0 %v374
        %v458 = vpop.f32.mrb[0].mxu0
        %v459 = vadd.f32 0.0, %v458
        %v460 = vpop.f32.mrb[0].mxu0
        %v461 = vpop.f32.mrb[0].mxu0
        %v462 = vadd.f32 0.0, %v461
        %v463 = vpop.f32.mrb[0].mxu0
        %464 = vdwg.mxu0
        %v465 = vadd.f32 %v459, %v462
        %v466 = vrot.slane %v465, 4
        %v467 = vadd.f32 %v465, %v466
        %v468 = vrot.slane %v467, 2
        %v469 = vadd.f32 %v467, %v468
        %v470 = vrot.slane %v469, 1
        %v471 = vadd.f32 %v469, %v470
        %v472 = vrcp.pop 16.0
        %v473 = vmul.f32 %v471, %v472
        %v474 = vsub.f32 %v459, %v473
        %v475 = vsub.f32 %v462, %v473
        %v476 = vmul.f32 %v474, %v474
        %v477 = vmul.f32 %v475, %v475
        %v478 = vadd.f32 %v476, %v477
        %v479 = vrot.slane %v478, 4
        %v480 = vadd.f32 %v478, %v479
        %v481 = vrot.slane %v480, 2
        %v482 = vadd.f32 %v480, %v481
        %v483 = vrot.slane %v482, 1
        %v484 = vadd.f32 %v482, %v483
        %v485 = vmul.f32 %v484, %v472
        %v486 = vld [vmem:[%s333] sm:$0x1]
        %v487 = vadd.f32 %v485, 1e-05
        %v488 = vrsqrt.pop %v487
        %v489 = vmul.f32 %v486, %v488
        %v491 = vlaneseq
        %v492 = vshrl.u32 %v491, 7
        %v493 = vsub.s32 0, %v492
        %v494 = vrot.slane %v489, %v493
        %v496 = vmul.f32 %v474, %v494
        %v497 = vmul.f32 %v475, %v494
        %v498 = vld [vmem:[%s336] sm:$0x1]
        %v500 = vlaneseq
        %v501 = vshrl.u32 %v500, 7
        %v502 = vsub.s32 0, %v501
        %v503 = vrot.slane %v498, %v502
        %v505 = vadd.f32 %v496, %v503
        %v506 = vadd.f32 %v497, %v503
        %v507 = vmax.f32 %v505, 0.0
        %v508 = vmax.f32 %v506, 0.0
        %v509 = vld [vmem:[#allocation8] sm:$0xff]
        %v510 = vld [vmem:[#allocation8 + $0x8] sm:$0xff]
        %v511 = vpack.c.bf16 %v508, %v507
        %v512 = vld [vmem:[%s296] sm:$0xf]
        %v513 = vld [vmem:[%s296 + $0x4] sm:$0xf]
        %v514 = vld [vmem:[%s296 + $0x8] sm:$0xf]
        %v515 = vld [vmem:[%s296 + $0xc] sm:$0xf]
        %v516 = vld [vmem:[%s296 + $0x10] sm:$0xf]
        %v517 = vld [vmem:[%s296 + $0x14] sm:$0xf]
        %v518 = vld [vmem:[%s296 + $0x18] sm:$0xf]
        %v519 = vld [vmem:[%s296 + $0x1c] sm:$0xf]
        %v520 = vld [vmem:[%s296 + $0x20] sm:$0xf]
        %v521 = vld [vmem:[%s296 + $0x24] sm:$0xf]
        %v522 = vld [vmem:[%s296 + $0x28] sm:$0xf]
        %v523 = vld [vmem:[%s296 + $0x2c] sm:$0xf]
        %v524 = vld [vmem:[%s296 + $0x30] sm:$0xf]
        %v525 = vld [vmem:[%s296 + $0x34] sm:$0xf]
        %v526 = vld [vmem:[%s296 + $0x38] sm:$0xf]
        %v527 = vld [vmem:[%s296 + $0x3c] sm:$0xf]
        %v544 = vunpack.c.l.b16 %v512
        %v545 = vunpack.c.l.b16 %v513
        %v546 = vunpack.c.l.b16 %v514
        %v547 = vunpack.c.l.b16 %v515
        %v548 = vunpack.c.l.b16 %v516
        %v549 = vunpack.c.l.b16 %v517
        %v550 = vunpack.c.l.b16 %v518
        %v551 = vunpack.c.l.b16 %v519
        %v552 = vunpack.c.l.b16 %v520
        %v553 = vunpack.c.l.b16 %v521
        %v554 = vunpack.c.l.b16 %v522
        %v555 = vunpack.c.l.b16 %v523
        %v556 = vunpack.c.l.b16 %v524
        %v557 = vunpack.c.l.b16 %v525
        %v558 = vunpack.c.l.b16 %v526
        %v559 = vunpack.c.l.b16 %v527
        %v560 = vpack.c.b16 %v545, %v544
        %v561 = vpack.c.b16 %v547, %v546
        %v562 = vpack.c.b16 %v549, %v548
        %v563 = vpack.c.b16 %v551, %v550
        %v564 = vpack.c.b16 %v553, %v552
        %v565 = vpack.c.b16 %v555, %v554
        %v566 = vpack.c.b16 %v557, %v556
        %v567 = vpack.c.b16 %v559, %v558
        %576 = vmatprep.subr.bf16.mxu0 0
        %577 = vmatpush1.bf16.msra.mxu0 %v560
        %578 = vmatprep.subr.bf16.mxu0 0
        %579 = vmatpush1.bf16.msra.mxu0 %v561
        %580 = vmatprep.subr.bf16.mxu0 0
        %581 = vmatpush1.bf16.msra.mxu0 %v562
        %582 = vmatprep.subr.bf16.mxu0 0
        %583 = vmatpush1.bf16.msra.mxu0 %v563
        %584 = vmatprep.subr.bf16.mxu0 0
        %585 = vmatpush1.bf16.msra.mxu0 %v564
        %586 = vmatprep.subr.bf16.mxu0 0
        %587 = vmatpush1.bf16.msra.mxu0 %v565
        %588 = vmatprep.subr.bf16.mxu0 0
        %589 = vmatpush1.bf16.msra.mxu0 %v566
        %590 = vmatprep.subr.bf16.mxu0 0
        %591 = vmatpush1.bf16.msra.mxu0 %v567
        %592 = vmatprep.subr.bf16.mxu0 0
        %593 = vmatpush1.bf16.msra.mxu0 0
        %594 = vmatprep.subr.bf16.mxu0 0
        %595 = vmatpush1.bf16.msra.mxu0 0
        %596 = vmatprep.subr.bf16.mxu0 0
        %597 = vmatpush1.bf16.msra.mxu0 0
        %598 = vmatprep.subr.bf16.mxu0 0
        %599 = vmatpush1.bf16.msra.mxu0 0
        %600 = vmatprep.subr.bf16.mxu0 0
        %601 = vmatpush1.bf16.msra.mxu0 0
        %602 = vmatprep.subr.bf16.mxu0 0
        %603 = vmatpush1.bf16.msra.mxu0 0
        %604 = vmatprep.subr.bf16.mxu0 0
        %605 = vmatpush1.bf16.msra.mxu0 0
        %606 = vmatprep.subr.bf16.mxu0 0
        %607 = vmatpush1.bf16.msra.mxu0 0
        %608 = vmatprep.mubr.bf16.mxu0 0
        %609 = vmatmul.mubr.bf16.gmra.mrb[0].mxu0 %v511
        %v610 = vpop.f32.mrb[0].mxu0
        %v611 = vadd.f32 0.0, %v610
        %v612 = vpop.f32.mrb[0].mxu0
        %v613 = vpop.f32.mrb[0].mxu0
        %v614 = vadd.f32 0.0, %v613
        %v615 = vpop.f32.mrb[0].mxu0
        %616 = vdwg.mxu0
        %v617 = vadd.f32 %v509, %v611
        %v618 = vadd.f32 %v510, %v614
        %619 = vst [vmem:[#allocation8] sm:$0xff] %v617
        %620 = vst [vmem:[#allocation8 + $0x8] sm:$0xff] %v618
        // Predicated region
        $region61: #{tpu_custom_call.1} parent=43 // pred_check
          %p621 = pneg %p181
        $region62: #{tpu_custom_call.1} parent=43 // pred_check_branch
          %623 = sbr.rel (%p621) target = $region64
        $region63: #{tpu_custom_call.1} parent=43 // pred_region
          %s625 = ssub.s32 256, 256
          %626 = vsyncadd [#allocation4], %s625
          %s627 = sshll.u32 [#allocation8], 4
          %s628 = int_to_ptr.vmem [resolvable:$true] %s627
          %633 = dma.vmem_to_hbm [thread:$0]  %s628, 256, %s6, [#allocation4], 128, 128, 8
        $region64: #{tpu_custom_call.1} parent=43 // pred_fallthru
          _
        // Predicated region
        $region65: #{tpu_custom_call.1} parent=43 // pred_check
          %p634 = pneg %p181
        $region66: #{tpu_custom_call.1} parent=43 // pred_check_branch
          %636 = sbr.rel (%p634) target = $region68
        $region67: #{tpu_custom_call.1} parent=43 // pred_region
          %637 = dma.done [#allocation4], 256
        $region68: #{tpu_custom_call.1} parent=43 // pred_fallthru
          _
      $region44: #{tpu_custom_call.1} parent=5 // pred_fallthru
        _
      %p638 = scmp.le.s32.totalorder 2, %s17
      // Predicated region
      $region69: #{tpu_custom_call.1} parent=5 // pred_check
        %p639 = pneg %p638
      $region70: #{tpu_custom_call.1} parent=5 // pred_check_branch
        %641 = sbr.rel (%p639) target = $region72
      $region71: #{tpu_custom_call.1} parent=5 // pred_region
        %s642 = ssub.s32 %s17, 2
      $region72: #{tpu_custom_call.1} parent=5 // pred_fallthru
        _
    $region6: #{tpu_custom_call.1} parent=1 // loop_footer
      %s21 = sadd.s32 1, %s17
    $region7: #{tpu_custom_call.1} parent=1 // loop_footer_branch
      %16 = sbr.rel target = $region3
    $region8: #{tpu_custom_call.1} parent=1 // loop_exit
      _
    %643 = vsyncpa [#allocation3], 1
    %s644 = scalar_lea.sflag [#allocation3], 1
    %645 = vsyncpa %s644, 1
    %646 = vsyncpa [#allocation6], 1
    %s647 = scalar_lea.sflag [#allocation6], 1
    %648 = vsyncpa %s647, 1
    %649 = vsyncpa [#allocation4], 1
    %s650 = scalar_lea.sflag [#allocation4], 1
    %651 = vsyncpa %s650, 1

</llo_original>
